<compile_context>
chip_gen: v7x
topology: tpu7x:2x2x1
jax: 0.10.0
libtpu: 0.0.40
codegen_flags: <defaults>
</compile_context>

<pallas_src>
import math

import jax
import jax.numpy as jnp
from jax.experimental import pallas as pl
from jax.experimental.pallas import tpu as pltpu

_LANE = 128
_MiB = 1024 * 1024


def _resolve_view_shape(total, target_shape):
    """torch.Tensor.view-style shape resolution (single -1 allowed)."""
    shape = list(target_shape)
    neg = [i for i, s in enumerate(shape) if s == -1]
    if len(neg) > 1:
        raise ValueError("only one dimension can be inferred (-1)")
    if neg:
        known = 1
        for i, s in enumerate(shape):
            if i != neg[0]:
                known *= s
        if known <= 0 or total % known != 0:
            raise ValueError(
                f"cannot view {total} elements as shape {tuple(target_shape)}")
        shape[neg[0]] = total // known
    if math.prod(shape) != total:
        raise ValueError(
            f"cannot view {total} elements as shape {tuple(target_shape)}")
    return tuple(shape)


def _make_hbm_copy_kernel(rows, chunk_rows, n_chunks):
    """Kernel: chunked HBM->HBM DMA copy, all chunks in flight together."""
    chunks = []
    for c in range(n_chunks):
        start = c * chunk_rows
        size = min(chunk_rows, rows - start)
        chunks.append((start, size))

    def kernel(x_hbm, o_hbm, sems):
        # Issue every chunk first (several DMAs in flight), then wait on all.
        for c, (start, size) in enumerate(chunks):
            pltpu.make_async_copy(
                x_hbm.at[pl.ds(start, size)],
                o_hbm.at[pl.ds(start, size)],
                sems.at[c],
            ).start()
        for c, (start, size) in enumerate(chunks):
            pltpu.make_async_copy(
                x_hbm.at[pl.ds(start, size)],
                o_hbm.at[pl.ds(start, size)],
                sems.at[c],
            ).wait()

    return kernel


def reshape_pallas(x, target_shape, *, materialize=False,
                   max_lanes=8192, target_chunk_bytes=32 * _MiB,
                   max_in_flight=8):
    """Pallas equivalent of torch.Tensor.view(target_shape).

    Default: metadata-only reshape (zero HBM traffic), matching `view`
    semantics for a contiguous row-major array.  With `materialize=True`,
    the data is copied into a fresh buffer via a Pallas HBM->HBM DMA kernel.
    """
    total = int(x.size)
    shape = _resolve_view_shape(total, target_shape)

    # Fast/default path: pure metadata, no kernel, no HBM traffic.
    if not materialize:
        return x.reshape(shape)

    dt = jnp.dtype(x.dtype)
    itemsize = dt.itemsize
    # Sub-byte / packed dtypes: don't reason about their sublane tiling here.
    if itemsize < 1 or dt.name in ("bool", "int4", "uint4", "float4_e2m1fn"):
        return x.reshape(shape)

    if total == 0 or total % _LANE != 0:
        # No pad-free lane-dense factorization; a copy kernel would need
        # padding (extra HBM traffic) -> metadata-only result instead.
        return x.reshape(shape)

    # Lane-dense 2D factorization of the flat buffer (metadata-only for a
    # contiguous array): last dim = largest divisor of `total` that is a
    # multiple of 128, capped at `max_lanes`.
    C = _LANE
    c = (min(max_lanes, total) // _LANE) * _LANE
    while c >= _LANE:
        if total % c == 0:
            C = c
            break
        c -= _LANE
    rows = total // C

    # Chunking: a handful of long DMA bursts (~target_chunk_bytes each),
    # issued together so they overlap.  Sublane-aligned rows per chunk where
    # possible (f32: 8, bf16: 16, int8: 32).
    total_bytes = total * itemsize
    min_sub = max(1, 32 // itemsize)
    n_chunks = max(1, min(max_in_flight, rows,
                          -(-total_bytes // target_chunk_bytes)))
    chunk_rows = -(-rows // n_chunks)
    if chunk_rows % min_sub != 0 and chunk_rows < rows:
        chunk_rows = min(rows, ((chunk_rows + min_sub - 1) // min_sub) * min_sub)
    n_chunks = -(-rows // chunk_rows)

    x2d = x.reshape(rows, C)  # metadata-only

    kernel = _make_hbm_copy_kernel(rows, chunk_rows, n_chunks)

    out2d = pl.pallas_call(
        kernel,
        out_shape=jax.ShapeDtypeStruct((rows, C), x.dtype),
        in_specs=[pl.BlockSpec(memory_space=pl.ANY)],
        out_specs=pl.BlockSpec(memory_space=pl.ANY),
        scratch_shapes=[pltpu.SemaphoreType.DMA((n_chunks,))],
        compiler_params=pltpu.CompilerParams(
            # No VMEM staging buffers are used; keep the scoped limit modest
            # so VMEM stays free for neighboring kernels (v7x has 64 MiB).
            vmem_limit_bytes=16 * _MiB,
        ),
        cost_estimate=pl.CostEstimate(
            flops=0, transcendentals=0, bytes_accessed=2 * total_bytes),
    )(x2d)

    # Metadata-only: present the copied buffer with the requested view shape.
    return out2d.reshape(shape)


if __name__ == "__main__":
    key = jax.random.PRNGKey(0)
    # small NCHW input, consistent with a conv-style pipeline
    x = jax.random.normal(key, (2, 4, 16, 16), dtype=jnp.float32)

    # Default path: Reshape(2, -1) -> (2, 1024), metadata-only (zero traffic).
    y = reshape_pallas(x, (2, -1))
    jax.block_until_ready(y)
    ref = x.reshape(2, -1)
    assert y.shape == ref.shape and y.dtype == ref.dtype
    assert bool(jnp.all(y == ref))

    # Materialized copy path: Reshape(8, 16, 16) via the HBM->HBM DMA kernel.
    y2 = reshape_pallas(x, (8, 16, 16), materialize=True)
    jax.block_until_ready(y2)
    ref2 = x.reshape(8, 16, 16)
    assert y2.shape == ref2.shape and y2.dtype == ref2.dtype
    assert bool(jnp.all(y2 == ref2))

    # Exercise the multi-chunk (multiple in-flight DMAs) path with a tiny
    # chunk budget, still semantically Reshape(2, -1).
    y3 = reshape_pallas(x, (2, -1), materialize=True,
                        target_chunk_bytes=4096, max_lanes=128)
    jax.block_until_ready(y3)
    assert y3.shape == ref.shape and bool(jnp.all(y3 == ref))

    print("KERNEL_OK")
</pallas_src>

<mosaic_0001>
module attributes {stable_mosaic.version = 11 : i64} {
  func.func @kernel(%arg0: memref<1x2048xf32, #tpu.memory_space<any>>, %arg1: memref<1x2048xf32, #tpu.memory_space<any>>, %arg2: memref<1x!tpu.dma_semaphore, #tpu.memory_space<semaphore_mem>>) attributes {dimension_semantics = [], scalar_prefetch = 0 : i64, scratch_operands = 1 : i64, tpu.core_type = #tpu.core_type<tc>} {
    %c0_i32 = arith.constant 0 : i32
    %c0_i32_0 = arith.constant 0 : i32
    %c0_i32_1 = arith.constant 0 : i32
    %0 = tpu.memref_slice %arg0[%c0_i32_0, %c0_i32_1] : memref<1x2048xf32, #tpu.memory_space<any>> -> memref<1x2048xf32, #tpu.memory_space<any>>
    %c0_i32_2 = arith.constant 0 : i32
    %c0_i32_3 = arith.constant 0 : i32
    %1 = tpu.memref_slice %arg1[%c0_i32_2, %c0_i32_3] : memref<1x2048xf32, #tpu.memory_space<any>> -> memref<1x2048xf32, #tpu.memory_space<any>>
    %2 = tpu.memref_slice %arg2[%c0_i32] : memref<1x!tpu.dma_semaphore, #tpu.memory_space<semaphore_mem>> -> memref<1x!tpu.dma_semaphore, #tpu.memory_space<semaphore_mem>>
    %3 = tpu.memref_squeeze %2 : memref<1x!tpu.dma_semaphore, #tpu.memory_space<semaphore_mem>> -> memref<!tpu.dma_semaphore, #tpu.memory_space<semaphore_mem>>
    tpu.enqueue_dma source(%0 : memref<1x2048xf32, #tpu.memory_space<any>>) target(%1 : memref<1x2048xf32, #tpu.memory_space<any>>) target_semaphore(%3 : memref<!tpu.dma_semaphore, #tpu.memory_space<semaphore_mem>>)
    %c0_i32_4 = arith.constant 0 : i32
    %c0_i32_5 = arith.constant 0 : i32
    %c0_i32_6 = arith.constant 0 : i32
    %4 = tpu.memref_slice %arg0[%c0_i32_5, %c0_i32_6] : memref<1x2048xf32, #tpu.memory_space<any>> -> memref<1x2048xf32, #tpu.memory_space<any>>
    %c0_i32_7 = arith.constant 0 : i32
    %c0_i32_8 = arith.constant 0 : i32
    %5 = tpu.memref_slice %arg1[%c0_i32_7, %c0_i32_8] : memref<1x2048xf32, #tpu.memory_space<any>> -> memref<1x2048xf32, #tpu.memory_space<any>>
    %6 = tpu.memref_slice %arg2[%c0_i32_4] : memref<1x!tpu.dma_semaphore, #tpu.memory_space<semaphore_mem>> -> memref<1x!tpu.dma_semaphore, #tpu.memory_space<semaphore_mem>>
    %7 = tpu.memref_squeeze %6 : memref<1x!tpu.dma_semaphore, #tpu.memory_space<semaphore_mem>> -> memref<!tpu.dma_semaphore, #tpu.memory_space<semaphore_mem>>
    tpu.wait_dma2 semaphore(%7 : memref<!tpu.dma_semaphore, #tpu.memory_space<semaphore_mem>>) src(%4 : memref<1x2048xf32, #tpu.memory_space<any>>) dst(%5 : memref<1x2048xf32, #tpu.memory_space<any>>)
    return
  }
}

</mosaic_0001>

<llo_original>
// kernel: tpu_custom_call.1
$region0: #{tpu_custom_call.1}
  #allocation0 [shape = 'u32[]', space=smem, size = 0x4, offset = 0x4, fixed_abs, tag = 'smem constant byte address 0x4 - core index']
  #allocation1 [shape = 'u32[144,128]{1,0:T(1,128)}', space=vmem, size = 0x12000, scoped, tag = 'internal scratch']
  #allocation2 [shape = 's32[1]{0}', space=sflag, size = 0x4, scoped, tag = 'scratch operand']
  #allocation3 [shape = 's32[]', space=sflag, size = 0x4, offset = 0, fixed_abs, tag = 'sflag constant byte address 0x0 - dummy sync flag']
  #allocation4 [shape = 'u32[0]{0}', space=smem, size = 0, offset = 0, fixed_abs, tag = 'smem constant byte address 0x0 - null']
  %s0 = inlined_call_operand.hbm [shape: f32[1,2048], index: 0, kind: input, shape index: {}]
  %s1 = inlined_call_operand.hbm [shape: f32[1,2048], index: 1, kind: output, shape index: {}]
  %s2 = sld [smem:[#allocation0]]
  $region2: #{tpu_custom_call.1} parent=0
    _
  %s4 = ssub.s32 1, %s2
  %s5 = scalar_select 0, %s4, %s2
  %s7 = sshll.u32 1, 14
  %s8 = sxor.u32 4294967295, %s7
  %s11 = sshll.u32 3, 24
  %s12 = sxor.u32 4294967295, %s11
  %s13 = sand.u32 0, %s12
  %s15 = sor.u32 %s13, 0
  %18 = dma.general %s0, 256, %s1, [#allocation2], [#allocation3], [#allocation4], %s15, 0
  %s19 = smul.u32 1, 16
  %s20 = sshll.u32 %s19, 4
  %21 = dma.done [#allocation2], %s20
  %22 = vsyncmov [#allocation2]
  %s23 = vpop.sfrf %22
  %p24 = scmp.eq.s32.totalorder %s23, 0
  %p25 = pneg %p24
  %27 = shalt.err (%p25)

</llo_original>
